<compile_context>
chip_gen: v6e
topology: v6e:2x2x1
jax: 0.10.0
libtpu: 0.0.40
codegen_flags: <defaults>
</compile_context>

<pallas_src>
import jax
import jax.numpy as jnp
from jax.experimental import pallas as pl
from jax.experimental.pallas import tpu as pltpu


def _round_up(x, m):
    return (x + m - 1) // m * m


def _noatt_kernel(x_ref, w1_ref, b1_ref, w2_ref, b2_ref, o_ref):
    # x_ref: (TB, C, HW) bf16 batch tile.  The 1/(H*W) average-pool scale is
    # folded into w1 in the wrapper, so only a sum reduction is needed here
    # (accumulate in f32 to keep precision).
    pooled = jnp.sum(x_ref[...].astype(jnp.float32), axis=-1)          # (TB, C)

    # TODO(synk): the reference calls functional F.dropout (training=True by
    # default); treated as identity here (eval semantics).

    # feature_transform: Linear(dim_v, dim_h) + tanh  (bf16 MXU, f32 acc)
    h = jnp.dot(pooled.astype(jnp.bfloat16), w1_ref[...],
                preferred_element_type=jnp.float32) + b1_ref[...]      # (TB, DHp)
    h = jnp.tanh(h)

    # answer_sampler: Linear(dim_h, num_classes)
    out = jnp.dot(h.astype(jnp.bfloat16), w2_ref[...],
                  preferred_element_type=jnp.float32) + b2_ref[...]    # (TB, NCp)
    o_ref[...] = out.astype(o_ref.dtype)


def noatt_forward(input_v, w1, b1, w2, b2):
    """input_v: (B, C, H, W) float32 (NCHW, like the PyTorch module).

    w1: (dim_v, dim_h), b1: (dim_h,), w2: (dim_h, num_classes), b2: (num_classes,).
    Returns (B, num_classes) float32.
    """
    B, C, H, W = input_v.shape
    HW = H * W
    dim_h = w1.shape[1]
    num_classes = w2.shape[1]

    # Lane-align the (small) hidden / class dims -> dense, unmasked stores and
    # lane-dense weight tiles.  Padded columns are zero and are sliced off.
    dh_p = _round_up(dim_h, 128)
    nc_p = _round_up(num_classes, 128)

    # Batch tile: largest tile whose double-buffered x stream fits a budget
    # that is safe for v7x (64 MiB physical / 32 MiB scoped) as well as
    # v5e/v6e (128 MiB).
    x_dtype = jnp.bfloat16
    x_bytes = jnp.dtype(x_dtype).itemsize
    x_budget = 16 << 20                       # total across both x buffers
    tb = x_budget // max(2 * C * HW * x_bytes, 1)
    tb = max(8, min(512, (tb // 8) * 8))
    tb = min(tb, _round_up(B, 8))
    b_p = _round_up(B, tb)

    # --- parameter / input prep (plain JAX glue) ----------------------------
    # Fold the 1/(H*W) average-pool scale into w1 (scale in f32, then cast).
    w1_p = jnp.zeros((C, dh_p), jnp.float32).at[:, :dim_h].set(
        w1.astype(jnp.float32) / float(HW)).astype(jnp.bfloat16)
    b1_p = jnp.zeros((1, dh_p), jnp.float32).at[0, :dim_h].set(b1)
    w2_p = jnp.zeros((dh_p, nc_p), jnp.float32).at[:dim_h, :num_classes].set(
        w2).astype(jnp.bfloat16)
    b2_p = jnp.zeros((1, nc_p), jnp.float32).at[0, :num_classes].set(b2)

    x = input_v.reshape(B, C, HW).astype(x_dtype)
    if b_p != B:
        x = jnp.pad(x, ((0, b_p - B), (0, 0), (0, 0)))

    grid = (b_p // tb,)

    # Explicit VMEM request: double-buffered x + out tiles, resident weights,
    # plus margin; clamped to the smallest per-chip scoped default (32 MiB).
    need = (2 * tb * C * HW * x_bytes          # x double-buffer (bf16)
            + 2 * tb * nc_p * 4                # out double-buffer (f32)
            + 2 * (C * dh_p + dh_p * nc_p) * 2  # weights (bf16)
            + 2 * (dh_p + nc_p) * 4)           # biases (f32)
    vmem_limit = int(min(max(need + (4 << 20), 16 << 20), 32 << 20))

    cost = pl.CostEstimate(
        flops=2 * b_p * C * dh_p + 2 * b_p * dh_p * nc_p + b_p * C * HW,
        transcendentals=b_p * dh_p,
        bytes_accessed=(b_p * C * HW * x_bytes
                        + (C * dh_p + dh_p * nc_p) * 2
                        + (dh_p + nc_p) * 4
                        + b_p * nc_p * 4),
    )

    out_p = pl.pallas_call(
        _noatt_kernel,
        out_shape=jax.ShapeDtypeStruct((b_p, nc_p), jnp.float32),
        grid=grid,
        in_specs=[
            pl.BlockSpec((tb, C, HW), lambda i: (i, 0, 0)),   # x: streamed tile
            pl.BlockSpec((C, dh_p), lambda i: (0, 0)),        # w1: resident
            pl.BlockSpec((1, dh_p), lambda i: (0, 0)),        # b1: resident
            pl.BlockSpec((dh_p, nc_p), lambda i: (0, 0)),     # w2: resident
            pl.BlockSpec((1, nc_p), lambda i: (0, 0)),        # b2: resident
        ],
        out_specs=pl.BlockSpec((tb, nc_p), lambda i: (i, 0)),
        compiler_params=pltpu.CompilerParams(
            dimension_semantics=("parallel",),
            vmem_limit_bytes=vmem_limit,
        ),
        cost_estimate=cost,
    )(x, w1_p, b1_p, w2_p, b2_p)

    # Strip batch / class padding.
    return out_p[:B, :num_classes]


def reference_forward(input_v, w1, b1, w2, b2):
    """Plain-JAX f32 reference mirroring the PyTorch forward (eval mode)."""
    B = input_v.shape[0]
    pooled = jnp.mean(input_v, axis=(2, 3)).reshape(B, -1)
    h = jnp.tanh(pooled @ w1 + b1)
    return h @ w2 + b2


if __name__ == "__main__":
    # Synthetic config consistent with the module's __init__:
    #   opt['dim_v'] = 32, opt['vas']['dim_h'] = 32,
    #   opt['vas']['activation'] = 'tanh', num_classes = len(vocab_answers) = 8
    B, dim_v, H, W = 2, 32, 16, 16
    dim_h, num_classes = 32, 8

    key = jax.random.PRNGKey(0)
    k_x, k_w1, k_b1, k_w2, k_b2 = jax.random.split(key, 5)

    input_v = jax.random.normal(k_x, (B, dim_v, H, W), dtype=jnp.float32)

    # Deterministic parameter init (synthetic; not loaded from a checkpoint).
    w1 = jax.random.normal(k_w1, (dim_v, dim_h), dtype=jnp.float32) * 0.1
    b1 = jax.random.normal(k_b1, (dim_h,), dtype=jnp.float32) * 0.1
    w2 = jax.random.normal(k_w2, (dim_h, num_classes), dtype=jnp.float32) * 0.1
    b2 = jax.random.normal(k_b2, (num_classes,), dtype=jnp.float32) * 0.1

    out = noatt_forward(input_v, w1, b1, w2, b2)
    out = jax.block_until_ready(out)

    ref = reference_forward(input_v, w1, b1, w2, b2)
    assert out.shape == (B, num_classes)
    # bf16 MXU operands (f32 accumulation) -> relaxed tolerance vs f32 ref.
    assert jnp.allclose(out, ref, atol=5e-3, rtol=5e-3), "mismatch vs reference"

    print("KERNEL_OK")
</pallas_src>

<mosaic_0001>
module attributes {stable_mosaic.version = 11 : i64} {
  func.func @_noatt_kernel(%arg0: i32, %arg1: memref<8x32x256xbf16, #tpu.memory_space<vmem>>, %arg2: memref<32x128xbf16, #tpu.memory_space<vmem>>, %arg3: memref<1x128xf32, #tpu.memory_space<vmem>>, %arg4: memref<128x128xbf16, #tpu.memory_space<vmem>>, %arg5: memref<1x128xf32, #tpu.memory_space<vmem>>, %arg6: memref<8x128xf32, #tpu.memory_space<vmem>>) attributes {dimension_semantics = [#tpu.dimension_semantics<parallel>], iteration_bounds = array<i64: 1>, scalar_prefetch = 0 : i64, scratch_operands = 0 : i64, tpu.core_type = #tpu.core_type<tc>, window_params = [{transform_indices = @transform_0, window_bounds = array<i64: 8, 32, 256>}, {pipeline_mode = #tpu.pipeline_mode<synchronous>, transform_indices = @transform_1, window_bounds = array<i64: 32, 128>}, {pipeline_mode = #tpu.pipeline_mode<synchronous>, transform_indices = @transform_2, window_bounds = array<i64: 1, 128>}, {pipeline_mode = #tpu.pipeline_mode<synchronous>, transform_indices = @transform_3, window_bounds = array<i64: 128, 128>}, {pipeline_mode = #tpu.pipeline_mode<synchronous>, transform_indices = @transform_4, window_bounds = array<i64: 1, 128>}, {transform_indices = @transform_5, window_bounds = array<i64: 8, 128>}]} {
    %c0 = arith.constant 0 : index
    %c0_0 = arith.constant 0 : index
    %c0_1 = arith.constant 0 : index
    %0 = vector.load %arg1[%c0, %c0_0, %c0_1] : memref<8x32x256xbf16, #tpu.memory_space<vmem>>, vector<8x32x256xbf16>
    %1 = arith.extf %0 : vector<8x32x256xbf16> to vector<8x32x256xf32>
    %cst = arith.constant dense<0.000000e+00> : vector<8x32xf32>
    %2 = vector.multi_reduction <add>, %1, %cst [2] : vector<8x32x256xf32> to vector<8x32xf32>
    %3 = arith.truncf %2 : vector<8x32xf32> to vector<8x32xbf16>
    %c0_2 = arith.constant 0 : index
    %c0_3 = arith.constant 0 : index
    %4 = vector.load %arg2[%c0_2, %c0_3] : memref<32x128xbf16, #tpu.memory_space<vmem>>, vector<32x128xbf16>
    %cst_4 = arith.constant dense<0.000000e+00> : vector<8x128xf32>
    %5 = tpu.matmul %3, %4, %cst_4 {dimension_numbers = #tpu.dot_dimension_numbers<[1], [0], [0], [1], [0, 0, 1, 1], [], []>} : vector<8x32xbf16>, vector<32x128xbf16>, vector<8x128xf32> -> vector<8x128xf32>
    %c0_5 = arith.constant 0 : index
    %c0_6 = arith.constant 0 : index
    %6 = vector.load %arg3[%c0_5, %c0_6] : memref<1x128xf32, #tpu.memory_space<vmem>>, vector<1x128xf32>
    %7 = vector.broadcast %6 : vector<1x128xf32> to vector<8x128xf32>
    %8 = arith.addf %5, %7 : vector<8x128xf32>
    %9 = math.tanh %8 : vector<8x128xf32>
    %10 = arith.truncf %9 : vector<8x128xf32> to vector<8x128xbf16>
    %c0_7 = arith.constant 0 : index
    %c0_8 = arith.constant 0 : index
    %11 = vector.load %arg4[%c0_7, %c0_8] : memref<128x128xbf16, #tpu.memory_space<vmem>>, vector<128x128xbf16>
    %cst_9 = arith.constant dense<0.000000e+00> : vector<8x128xf32>
    %12 = tpu.matmul %10, %11, %cst_9 {dimension_numbers = #tpu.dot_dimension_numbers<[1], [0], [0], [1], [0, 0, 1, 1], [], []>} : vector<8x128xbf16>, vector<128x128xbf16>, vector<8x128xf32> -> vector<8x128xf32>
    %c0_10 = arith.constant 0 : index
    %c0_11 = arith.constant 0 : index
    %13 = vector.load %arg5[%c0_10, %c0_11] : memref<1x128xf32, #tpu.memory_space<vmem>>, vector<1x128xf32>
    %14 = vector.broadcast %13 : vector<1x128xf32> to vector<8x128xf32>
    %15 = arith.addf %12, %14 : vector<8x128xf32>
    %c0_12 = arith.constant 0 : index
    %c0_13 = arith.constant 0 : index
    %16 = vector.load %arg6[%c0_12, %c0_13] : memref<8x128xf32, #tpu.memory_space<vmem>>, vector<8x128xf32>
    tpu.vector_store %arg6[%c0_12, %c0_13], %15 {strides = array<i32>} : memref<8x128xf32, #tpu.memory_space<vmem>>, vector<8x128xf32>,
    return
  }
  func.func @transform_0(%arg0: i32) -> (i32, i32, i32) {
    %c0_i32 = arith.constant 0 : i32
    %c0_i32_0 = arith.constant 0 : i32
    %c0_i32_1 = arith.constant 0 : i32
    return %arg0, %c0_i32, %c0_i32_0 : i32, i32, i32
  }
  func.func @transform_1(%arg0: i32) -> (i32, i32) {
    %c0_i32 = arith.constant 0 : i32
    %c0_i32_0 = arith.constant 0 : i32
    %c0_i32_1 = arith.constant 0 : i32
    return %c0_i32, %c0_i32_0 : i32, i32
  }
  func.func @transform_2(%arg0: i32) -> (i32, i32) {
    %c0_i32 = arith.constant 0 : i32
    %c0_i32_0 = arith.constant 0 : i32
    %c0_i32_1 = arith.constant 0 : i32
    return %c0_i32, %c0_i32_0 : i32, i32
  }
  func.func @transform_3(%arg0: i32) -> (i32, i32) {
    %c0_i32 = arith.constant 0 : i32
    %c0_i32_0 = arith.constant 0 : i32
    %c0_i32_1 = arith.constant 0 : i32
    return %c0_i32, %c0_i32_0 : i32, i32
  }
  func.func @transform_4(%arg0: i32) -> (i32, i32) {
    %c0_i32 = arith.constant 0 : i32
    %c0_i32_0 = arith.constant 0 : i32
    %c0_i32_1 = arith.constant 0 : i32
    return %c0_i32, %c0_i32_0 : i32, i32
  }
  func.func @transform_5(%arg0: i32) -> (i32, i32) {
    %c0_i32 = arith.constant 0 : i32
    %c0_i32_0 = arith.constant 0 : i32
    return %arg0, %c0_i32 : i32, i32
  }
}

</mosaic_0001>

<llo_original>
// kernel: tpu_custom_call.1
$region0: #{tpu_custom_call.1}
  #allocation0 [shape = 'u32[]', space=smem, size = 0x4, offset = 0x4, fixed_abs, tag = 'smem constant byte address 0x4 - core index']
  #allocation1 [shape = 'u32[144,128]{1,0:T(1,128)}', space=vmem, size = 0x12000, scoped, tag = 'internal scratch']
  %s0 = inlined_call_operand.hbm [shape: bf16[8,32,256], index: 0, kind: input, shape index: {}]
  %s1 = inlined_call_operand.hbm [shape: bf16[32,128], index: 1, kind: input, shape index: {}]
  %s2 = inlined_call_operand.vmem [shape: f32[1,128], index: 2, kind: input, shape index: {}]
  %s3 = inlined_call_operand.hbm [shape: bf16[128,128], index: 3, kind: input, shape index: {}]
  %s4 = inlined_call_operand.vmem [shape: f32[1,128], index: 4, kind: input, shape index: {}]
  %s5 = inlined_call_operand.hbm [shape: f32[8,128], index: 5, kind: output, shape index: {}]
  %s6 = sld [smem:[#allocation0]]
  $region42: #{tpu_custom_call.1} parent=0
    _
  %s8 = ssub.s32 1, %s6
  %s9 = scalar_select 0, %s8, %s6
  $region1: #{tpu_custom_call.1} parent=0
    #allocation2 [shape = 'u8[131072]{0}', space=vmem, size = 0x20000, scoped, tag = 'input window, operand 0, single buffered']
    #allocation3 [shape = 's32[1]{0}', space=sflag, size = 0x4, scoped, tag = 'scoped memory for tpu_custom_call.1']
    #allocation4 [shape = 's32[1]{0}', space=sflag, size = 0x4, scoped, tag = 'scoped memory for tpu_custom_call.1']
    #allocation5 [shape = 'u8[8192]{0}', space=vmem, size = 0x2000, scoped, tag = 'input window, operand 1, single buffered']
    #allocation6 [shape = 's32[1]{0}', space=sflag, size = 0x4, scoped, tag = 'scoped memory for tpu_custom_call.1']
    #allocation7 [shape = 'u8[32768]{0}', space=vmem, size = 0x8000, scoped, tag = 'input window, operand 3, single buffered']
    #allocation8 [shape = 'u8[4096]{0}', space=vmem, size = 0x1000, scoped, tag = 'output window, operand 0, single buffered']
    %10 = vsyncpa [#allocation3], 0
    %11 = vsyncpa [#allocation6], 0
    %12 = vsyncpa [#allocation4], 0
    // Predicated region
    $region2: #{tpu_custom_call.1} parent=1 // pred_check
      _
    $region3: #{tpu_custom_call.1} parent=1 // pred_check_branch
      %14 = sbr.rel (0) target = $region5
    $region4: #{tpu_custom_call.1} parent=1 // pred_region
      %s16 = ssub.s32 4096, 4096
      %17 = vsyncadd [#allocation3], %s16
      %s18 = sshll.u32 [#allocation2], 4
      %s19 = int_to_ptr.vmem [resolvable:$true] %s18
      %24 = dma.hbm_to_vmem [thread:$0]  %s0, 4096, %s19, [#allocation3], 128, 128, 8
    $region5: #{tpu_custom_call.1} parent=1 // pred_fallthru
      _
    // Predicated region
    $region6: #{tpu_custom_call.1} parent=1 // pred_check
      _
    $region7: #{tpu_custom_call.1} parent=1 // pred_check_branch
      %26 = sbr.rel (0) target = $region9
    $region8: #{tpu_custom_call.1} parent=1 // pred_region
      %s28 = ssub.s32 256, 256
      %29 = vsyncadd [#allocation6], %s28
      %s30 = sshll.u32 [#allocation5], 4
      %s31 = int_to_ptr.vmem [resolvable:$true] %s30
      %36 = dma.hbm_to_vmem [thread:$0]  %s1, 256, %s31, [#allocation6], 64, 64, 4
    $region9: #{tpu_custom_call.1} parent=1 // pred_fallthru
      _
    // Predicated region
    $region10: #{tpu_custom_call.1} parent=1 // pred_check
      _
    $region11: #{tpu_custom_call.1} parent=1 // pred_check_branch
      %38 = sbr.rel (0) target = $region13
    $region12: #{tpu_custom_call.1} parent=1 // pred_region
      _
    $region13: #{tpu_custom_call.1} parent=1 // pred_fallthru
      _
    // Predicated region
    $region14: #{tpu_custom_call.1} parent=1 // pred_check
      _
    $region15: #{tpu_custom_call.1} parent=1 // pred_check_branch
      %40 = sbr.rel (0) target = $region17
    $region16: #{tpu_custom_call.1} parent=1 // pred_region
      %s42 = ssub.s32 1024, 1024
      %43 = vsyncadd [#allocation6], %s42
      %s44 = sshll.u32 [#allocation7], 4
      %s45 = int_to_ptr.vmem [resolvable:$true] %s44
      %50 = dma.hbm_to_vmem [thread:$0]  %s3, 1024, %s45, [#allocation6], 64, 64, 4
    $region17: #{tpu_custom_call.1} parent=1 // pred_fallthru
      _
    // Predicated region
    $region18: #{tpu_custom_call.1} parent=1 // pred_check
      _
    $region19: #{tpu_custom_call.1} parent=1 // pred_check_branch
      %52 = sbr.rel (0) target = $region21
    $region20: #{tpu_custom_call.1} parent=1 // pred_region
      _
    $region21: #{tpu_custom_call.1} parent=1 // pred_fallthru
      _
    // Predicated region
    $region22: #{tpu_custom_call.1} parent=1 // pred_check
      _
    $region23: #{tpu_custom_call.1} parent=1 // pred_check_branch
      %54 = sbr.rel (0) target = $region25
    $region24: #{tpu_custom_call.1} parent=1 // pred_region
      %55 = dma.done [#allocation3], 4096
    $region25: #{tpu_custom_call.1} parent=1 // pred_fallthru
      _
    // Predicated region
    $region26: #{tpu_custom_call.1} parent=1 // pred_check
      _
    $region27: #{tpu_custom_call.1} parent=1 // pred_check_branch
      %57 = sbr.rel (0) target = $region29
    $region28: #{tpu_custom_call.1} parent=1 // pred_region
      %58 = dma.done [#allocation6], 256
    $region29: #{tpu_custom_call.1} parent=1 // pred_fallthru
      _
    // Predicated region
    $region30: #{tpu_custom_call.1} parent=1 // pred_check
      _
    $region31: #{tpu_custom_call.1} parent=1 // pred_check_branch
      %60 = sbr.rel (0) target = $region33
    $region32: #{tpu_custom_call.1} parent=1 // pred_region
      %61 = dma.done [#allocation6], 1024
    $region33: #{tpu_custom_call.1} parent=1 // pred_fallthru
      _
    %v63 = vld [vmem:[#allocation2] sm:$0xff]
    %v64 = vld [vmem:[#allocation2 + $0x8] sm:$0xff]
    %v65 = vld [vmem:[#allocation2 + $0x10] sm:$0xff]
    %v66 = vld [vmem:[#allocation2 + $0x18] sm:$0xff]
    %v67 = vld [vmem:[#allocation2 + $0x20] sm:$0xff]
    %v68 = vld [vmem:[#allocation2 + $0x28] sm:$0xff]
    %v69 = vld [vmem:[#allocation2 + $0x30] sm:$0xff]
    %v70 = vld [vmem:[#allocation2 + $0x38] sm:$0xff]
    %v71 = vld [vmem:[#allocation2 + $0x40] sm:$0xff]
    %v72 = vld [vmem:[#allocation2 + $0x48] sm:$0xff]
    %v73 = vld [vmem:[#allocation2 + $0x50] sm:$0xff]
    %v74 = vld [vmem:[#allocation2 + $0x58] sm:$0xff]
    %v75 = vld [vmem:[#allocation2 + $0x60] sm:$0xff]
    %v76 = vld [vmem:[#allocation2 + $0x68] sm:$0xff]
    %v77 = vld [vmem:[#allocation2 + $0x70] sm:$0xff]
    %v78 = vld [vmem:[#allocation2 + $0x78] sm:$0xff]
    %v79 = vld [vmem:[#allocation2 + $0x80] sm:$0xff]
    %v80 = vld [vmem:[#allocation2 + $0x88] sm:$0xff]
    %v81 = vld [vmem:[#allocation2 + $0x90] sm:$0xff]
    %v82 = vld [vmem:[#allocation2 + $0x98] sm:$0xff]
    %v83 = vld [vmem:[#allocation2 + $0xa0] sm:$0xff]
    %v84 = vld [vmem:[#allocation2 + $0xa8] sm:$0xff]
    %v85 = vld [vmem:[#allocation2 + $0xb0] sm:$0xff]
    %v86 = vld [vmem:[#allocation2 + $0xb8] sm:$0xff]
    %v87 = vld [vmem:[#allocation2 + $0xc0] sm:$0xff]
    %v88 = vld [vmem:[#allocation2 + $0xc8] sm:$0xff]
    %v89 = vld [vmem:[#allocation2 + $0xd0] sm:$0xff]
    %v90 = vld [vmem:[#allocation2 + $0xd8] sm:$0xff]
    %v91 = vld [vmem:[#allocation2 + $0xe0] sm:$0xff]
    %v92 = vld [vmem:[#allocation2 + $0xe8] sm:$0xff]
    %v93 = vld [vmem:[#allocation2 + $0xf0] sm:$0xff]
    %v94 = vld [vmem:[#allocation2 + $0xf8] sm:$0xff]
    %v95 = vunpack.c.l.bf16 %v63
    %v96 = vunpack.c.h.bf16 %v63
    %v97 = vunpack.c.l.bf16 %v64
    %v98 = vunpack.c.h.bf16 %v64
    %v99 = vunpack.c.l.bf16 %v65
    %v100 = vunpack.c.h.bf16 %v65
    %v101 = vunpack.c.l.bf16 %v66
    %v102 = vunpack.c.h.bf16 %v66
    %v103 = vunpack.c.l.bf16 %v67
    %v104 = vunpack.c.h.bf16 %v67
    %v105 = vunpack.c.l.bf16 %v68
    %v106 = vunpack.c.h.bf16 %v68
    %v107 = vunpack.c.l.bf16 %v69
    %v108 = vunpack.c.h.bf16 %v69
    %v109 = vunpack.c.l.bf16 %v70
    %v110 = vunpack.c.h.bf16 %v70
    %v111 = vunpack.c.l.bf16 %v71
    %v112 = vunpack.c.h.bf16 %v71
    %v113 = vunpack.c.l.bf16 %v72
    %v114 = vunpack.c.h.bf16 %v72
    %v115 = vunpack.c.l.bf16 %v73
    %v116 = vunpack.c.h.bf16 %v73
    %v117 = vunpack.c.l.bf16 %v74
    %v118 = vunpack.c.h.bf16 %v74
    %v119 = vunpack.c.l.bf16 %v75
    %v120 = vunpack.c.h.bf16 %v75
    %v121 = vunpack.c.l.bf16 %v76
    %v122 = vunpack.c.h.bf16 %v76
    %v123 = vunpack.c.l.bf16 %v77
    %v124 = vunpack.c.h.bf16 %v77
    %v125 = vunpack.c.l.bf16 %v78
    %v126 = vunpack.c.h.bf16 %v78
    %v127 = vunpack.c.l.bf16 %v79
    %v128 = vunpack.c.h.bf16 %v79
    %v129 = vunpack.c.l.bf16 %v80
    %v130 = vunpack.c.h.bf16 %v80
    %v131 = vunpack.c.l.bf16 %v81
    %v132 = vunpack.c.h.bf16 %v81
    %v133 = vunpack.c.l.bf16 %v82
    %v134 = vunpack.c.h.bf16 %v82
    %v135 = vunpack.c.l.bf16 %v83
    %v136 = vunpack.c.h.bf16 %v83
    %v137 = vunpack.c.l.bf16 %v84
    %v138 = vunpack.c.h.bf16 %v84
    %v139 = vunpack.c.l.bf16 %v85
    %v140 = vunpack.c.h.bf16 %v85
    %v141 = vunpack.c.l.bf16 %v86
    %v142 = vunpack.c.h.bf16 %v86
    %v143 = vunpack.c.l.bf16 %v87
    %v144 = vunpack.c.h.bf16 %v87
    %v145 = vunpack.c.l.bf16 %v88
    %v146 = vunpack.c.h.bf16 %v88
    %v147 = vunpack.c.l.bf16 %v89
    %v148 = vunpack.c.h.bf16 %v89
    %v149 = vunpack.c.l.bf16 %v90
    %v150 = vunpack.c.h.bf16 %v90
    %v151 = vunpack.c.l.bf16 %v91
    %v152 = vunpack.c.h.bf16 %v91
    %v153 = vunpack.c.l.bf16 %v92
    %v154 = vunpack.c.h.bf16 %v92
    %v155 = vunpack.c.l.bf16 %v93
    %v156 = vunpack.c.h.bf16 %v93
    %v157 = vunpack.c.l.bf16 %v94
    %v158 = vunpack.c.h.bf16 %v94
    %v159 = vadd.f32 %v95, %v96
    %160 = vadd.xlane.f32.xlu0 %v159
    %v161 = vpop.xlane.xlu0 %160
    %v162 = vadd.f32 %v97, %v98
    %163 = vadd.xlane.f32.xlu0 %v162
    %v164 = vpop.xlane.xlu0 %163
    %v165 = vadd.f32 %v99, %v100
    %166 = vadd.xlane.f32.xlu0 %v165
    %v167 = vpop.xlane.xlu0 %166
    %v168 = vadd.f32 %v101, %v102
    %169 = vadd.xlane.f32.xlu0 %v168
    %v170 = vpop.xlane.xlu0 %169
    %v171 = vadd.f32 %v103, %v104
    %172 = vadd.xlane.f32.xlu0 %v171
    %v173 = vpop.xlane.xlu0 %172
    %v174 = vadd.f32 %v105, %v106
    %175 = vadd.xlane.f32.xlu0 %v174
    %v176 = vpop.xlane.xlu0 %175
    %v177 = vadd.f32 %v107, %v108
    %178 = vadd.xlane.f32.xlu0 %v177
    %v179 = vpop.xlane.xlu0 %178
    %v180 = vadd.f32 %v109, %v110
    %181 = vadd.xlane.f32.xlu0 %v180
    %v182 = vpop.xlane.xlu0 %181
    %v183 = vadd.f32 %v111, %v112
    %184 = vadd.xlane.f32.xlu0 %v183
    %v185 = vpop.xlane.xlu0 %184
    %v186 = vadd.f32 %v113, %v114
    %187 = vadd.xlane.f32.xlu0 %v186
    %v188 = vpop.xlane.xlu0 %187
    %v189 = vadd.f32 %v115, %v116
    %190 = vadd.xlane.f32.xlu0 %v189
    %v191 = vpop.xlane.xlu0 %190
    %v192 = vadd.f32 %v117, %v118
    %193 = vadd.xlane.f32.xlu0 %v192
    %v194 = vpop.xlane.xlu0 %193
    %v195 = vadd.f32 %v119, %v120
    %196 = vadd.xlane.f32.xlu0 %v195
    %v197 = vpop.xlane.xlu0 %196
    %v198 = vadd.f32 %v121, %v122
    %199 = vadd.xlane.f32.xlu0 %v198
    %v200 = vpop.xlane.xlu0 %199
    %v201 = vadd.f32 %v123, %v124
    %202 = vadd.xlane.f32.xlu0 %v201
    %v203 = vpop.xlane.xlu0 %202
    %v204 = vadd.f32 %v125, %v126
    %205 = vadd.xlane.f32.xlu0 %v204
    %v206 = vpop.xlane.xlu0 %205
    %v207 = vadd.f32 %v127, %v128
    %208 = vadd.xlane.f32.xlu0 %v207
    %v209 = vpop.xlane.xlu0 %208
    %v210 = vadd.f32 %v129, %v130
    %211 = vadd.xlane.f32.xlu0 %v210
    %v212 = vpop.xlane.xlu0 %211
    %v213 = vadd.f32 %v131, %v132
    %214 = vadd.xlane.f32.xlu0 %v213
    %v215 = vpop.xlane.xlu0 %214
    %v216 = vadd.f32 %v133, %v134
    %217 = vadd.xlane.f32.xlu0 %v216
    %v218 = vpop.xlane.xlu0 %217
    %v219 = vadd.f32 %v135, %v136
    %220 = vadd.xlane.f32.xlu0 %v219
    %v221 = vpop.xlane.xlu0 %220
    %v222 = vadd.f32 %v137, %v138
    %223 = vadd.xlane.f32.xlu0 %v222
    %v224 = vpop.xlane.xlu0 %223
    %v225 = vadd.f32 %v139, %v140
    %226 = vadd.xlane.f32.xlu0 %v225
    %v227 = vpop.xlane.xlu0 %226
    %v228 = vadd.f32 %v141, %v142
    %229 = vadd.xlane.f32.xlu0 %v228
    %v230 = vpop.xlane.xlu0 %229
    %v231 = vadd.f32 %v143, %v144
    %232 = vadd.xlane.f32.xlu0 %v231
    %v233 = vpop.xlane.xlu0 %232
    %v234 = vadd.f32 %v145, %v146
    %235 = vadd.xlane.f32.xlu0 %v234
    %v236 = vpop.xlane.xlu0 %235
    %v237 = vadd.f32 %v147, %v148
    %238 = vadd.xlane.f32.xlu0 %v237
    %v239 = vpop.xlane.xlu0 %238
    %v240 = vadd.f32 %v149, %v150
    %241 = vadd.xlane.f32.xlu0 %v240
    %v242 = vpop.xlane.xlu0 %241
    %v243 = vadd.f32 %v151, %v152
    %244 = vadd.xlane.f32.xlu0 %v243
    %v245 = vpop.xlane.xlu0 %244
    %v246 = vadd.f32 %v153, %v154
    %247 = vadd.xlane.f32.xlu0 %v246
    %v248 = vpop.xlane.xlu0 %247
    %v249 = vadd.f32 %v155, %v156
    %250 = vadd.xlane.f32.xlu0 %v249
    %v251 = vpop.xlane.xlu0 %250
    %v252 = vadd.f32 %v157, %v158
    %253 = vadd.xlane.f32.xlu0 %v252
    %v254 = vpop.xlane.xlu0 %253
    %v255 = vpack.c.bf16 %v164, %v161
    %v256 = vpack.c.bf16 %v170, %v167
    %v257 = vpack.c.bf16 %v176, %v173
    %v258 = vpack.c.bf16 %v182, %v179
    %v259 = vpack.c.bf16 %v188, %v185
    %v260 = vpack.c.bf16 %v194, %v191
    %v261 = vpack.c.bf16 %v200, %v197
    %v262 = vpack.c.bf16 %v206, %v203
    %v263 = vpack.c.bf16 %v212, %v209
    %v264 = vpack.c.bf16 %v218, %v215
    %v265 = vpack.c.bf16 %v224, %v221
    %v266 = vpack.c.bf16 %v230, %v227
    %v267 = vpack.c.bf16 %v236, %v233
    %v268 = vpack.c.bf16 %v242, %v239
    %v269 = vpack.c.bf16 %v248, %v245
    %v270 = vpack.c.bf16 %v254, %v251
    %v271 = vld [vmem:[#allocation5] sm:$0xf]
    %v272 = vld [vmem:[#allocation5 + $0x4] sm:$0xf]
    %v273 = vld [vmem:[#allocation5 + $0x8] sm:$0xf]
    %v274 = vld [vmem:[#allocation5 + $0xc] sm:$0xf]
    %v275 = vld [vmem:[%s2] sm:$0x1]
    %v277 = vlaneseq
    %v278 = vshrl.u32 %v277, 7
    %v279 = vsub.s32 0, %v278
    %v280 = vrot.slane %v275, %v279
    %v298 = vunpack.c.l.b16 %v255
    %v299 = vunpack.c.h.b16 %v255
    %v300 = vunpack.c.l.b16 %v256
    %v301 = vunpack.c.h.b16 %v256
    %v302 = vunpack.c.l.b16 %v257
    %v303 = vunpack.c.h.b16 %v257
    %v304 = vunpack.c.l.b16 %v258
    %v305 = vunpack.c.h.b16 %v258
    %v306 = vunpack.c.l.b16 %v259
    %v307 = vunpack.c.h.b16 %v259
    %v308 = vunpack.c.l.b16 %v260
    %v309 = vunpack.c.h.b16 %v260
    %v310 = vunpack.c.l.b16 %v261
    %v311 = vunpack.c.h.b16 %v261
    %v312 = vunpack.c.l.b16 %v262
    %v313 = vunpack.c.h.b16 %v262
    %v314 = vunpack.c.l.b16 %v263
    %v315 = vunpack.c.h.b16 %v263
    %v316 = vunpack.c.l.b16 %v264
    %v317 = vunpack.c.h.b16 %v264
    %v318 = vunpack.c.l.b16 %v265
    %v319 = vunpack.c.h.b16 %v265
    %v320 = vunpack.c.l.b16 %v266
    %v321 = vunpack.c.h.b16 %v266
    %v322 = vunpack.c.l.b16 %v267
    %v323 = vunpack.c.h.b16 %v267
    %v324 = vunpack.c.l.b16 %v268
    %v325 = vunpack.c.h.b16 %v268
    %v326 = vunpack.c.l.b16 %v269
    %v327 = vunpack.c.h.b16 %v269
    %v328 = vunpack.c.l.b16 %v270
    %v329 = vunpack.c.h.b16 %v270
    %v330 = vlaneseq
    %v331 = vand.u32 %v330, 127
    %v332 = vlaneseq
    %v333 = vshrl.u32 %v332, 7
    %v334 = vsub.s32 %v331, %v333
    %v335 = vrot.slane %v298, %v334
    %v336 = vadd.s32 %v331, 4294967288
    %v337 = vlaneseq
    %v338 = vshrl.u32 %v337, 7
    %v339 = vsub.s32 %v336, %v338
    %v340 = vrot.slane %v299, %v339
    %vm341 = vcmask 130112
    %v342 = vsel %vm341, %v340, %v335
    %v343 = vadd.s32 %v331, 4294967280
    %v344 = vlaneseq
    %v345 = vshrl.u32 %v344, 7
    %v346 = vsub.s32 %v343, %v345
    %v347 = vrot.slane %v300, %v346
    %vm348 = vcmask 195712
    %v349 = vsel %vm348, %v347, %v342
    %v350 = vadd.s32 %v331, 4294967272
    %v351 = vlaneseq
    %v352 = vshrl.u32 %v351, 7
    %v353 = vsub.s32 %v350, %v352
    %v354 = vrot.slane %v301, %v353
    %vm355 = vcmask 261312
    %v356 = vsel %vm355, %v354, %v349
    %v357 = vlaneseq
    %v358 = vshrl.u32 %v357, 7
    %v359 = vsub.s32 %v331, %v358
    %v360 = vrot.slane %v302, %v359
    %v361 = vlaneseq
    %v362 = vshrl.u32 %v361, 7
    %v363 = vsub.s32 %v336, %v362
    %v364 = vrot.slane %v303, %v363
    %v365 = vsel %vm341, %v364, %v360
    %v366 = vlaneseq
    %v367 = vshrl.u32 %v366, 7
    %v368 = vsub.s32 %v343, %v367
    %v369 = vrot.slane %v304, %v368
    %v370 = vsel %vm348, %v369, %v365
    %v371 = vlaneseq
    %v372 = vshrl.u32 %v371, 7
    %v373 = vsub.s32 %v350, %v372
    %v374 = vrot.slane %v305, %v373
    %v375 = vsel %vm355, %v374, %v370
    %v376 = vlaneseq
    %v377 = vshrl.u32 %v376, 7
    %v378 = vsub.s32 %v331, %v377
    %v379 = vrot.slane %v306, %v378
    %v380 = vlaneseq
    %v381 = vshrl.u32 %v380, 7
    %v382 = vsub.s32 %v336, %v381
    %v383 = vrot.slane %v307, %v382
    %v384 = vsel %vm341, %v383, %v379
    %v385 = vlaneseq
    %v386 = vshrl.u32 %v385, 7
    %v387 = vsub.s32 %v343, %v386
    %v388 = vrot.slane %v308, %v387
    %v389 = vsel %vm348, %v388, %v384
    %v390 = vlaneseq
    %v391 = vshrl.u32 %v390, 7
    %v392 = vsub.s32 %v350, %v391
    %v393 = vrot.slane %v309, %v392
    %v394 = vsel %vm355, %v393, %v389
    %v395 = vlaneseq
    %v396 = vshrl.u32 %v395, 7
    %v397 = vsub.s32 %v331, %v396
    %v398 = vrot.slane %v310, %v397
    %v399 = vlaneseq
    %v400 = vshrl.u32 %v399, 7
    %v401 = vsub.s32 %v336, %v400
    %v402 = vrot.slane %v311, %v401
    %v403 = vsel %vm341, %v402, %v398
    %v404 = vlaneseq
    %v405 = vshrl.u32 %v404, 7
    %v406 = vsub.s32 %v343, %v405
    %v407 = vrot.slane %v312, %v406
    %v408 = vsel %vm348, %v407, %v403
    %v409 = vlaneseq
    %v410 = vshrl.u32 %v409, 7
    %v411 = vsub.s32 %v350, %v410
    %v412 = vrot.slane %v313, %v411
    %v413 = vsel %vm355, %v412, %v408
    %v414 = vlaneseq
    %v415 = vshrl.u32 %v414, 7
    %v416 = vsub.s32 %v331, %v415
    %v417 = vrot.slane %v314, %v416
    %v418 = vlaneseq
    %v419 = vshrl.u32 %v418, 7
    %v420 = vsub.s32 %v336, %v419
    %v421 = vrot.slane %v315, %v420
    %v422 = vsel %vm341, %v421, %v417
    %v423 = vlaneseq
    %v424 = vshrl.u32 %v423, 7
    %v425 = vsub.s32 %v343, %v424
    %v426 = vrot.slane %v316, %v425
    %v427 = vsel %vm348, %v426, %v422
    %v428 = vlaneseq
    %v429 = vshrl.u32 %v428, 7
    %v430 = vsub.s32 %v350, %v429
    %v431 = vrot.slane %v317, %v430
    %v432 = vsel %vm355, %v431, %v427
    %v433 = vlaneseq
    %v434 = vshrl.u32 %v433, 7
    %v435 = vsub.s32 %v331, %v434
    %v436 = vrot.slane %v318, %v435
    %v437 = vlaneseq
    %v438 = vshrl.u32 %v437, 7
    %v439 = vsub.s32 %v336, %v438
    %v440 = vrot.slane %v319, %v439
    %v441 = vsel %vm341, %v440, %v436
    %v442 = vlaneseq
    %v443 = vshrl.u32 %v442, 7
    %v444 = vsub.s32 %v343, %v443
    %v445 = vrot.slane %v320, %v444
    %v446 = vsel %vm348, %v445, %v441
    %v447 = vlaneseq
    %v448 = vshrl.u32 %v447, 7
    %v449 = vsub.s32 %v350, %v448
    %v450 = vrot.slane %v321, %v449
    %v451 = vsel %vm355, %v450, %v446
    %v452 = vlaneseq
    %v453 = vshrl.u32 %v452, 7
    %v454 = vsub.s32 %v331, %v453
    %v455 = vrot.slane %v322, %v454
    %v456 = vlaneseq
    %v457 = vshrl.u32 %v456, 7
    %v458 = vsub.s32 %v336, %v457
    %v459 = vrot.slane %v323, %v458
    %v460 = vsel %vm341, %v459, %v455
    %v461 = vlaneseq
    %v462 = vshrl.u32 %v461, 7
    %v463 = vsub.s32 %v343, %v462
    %v464 = vrot.slane %v324, %v463
    %v465 = vsel %vm348, %v464, %v460
    %v466 = vlaneseq
    %v467 = vshrl.u32 %v466, 7
    %v468 = vsub.s32 %v350, %v467
    %v469 = vrot.slane %v325, %v468
    %v470 = vsel %vm355, %v469, %v465
    %v471 = vlaneseq
    %v472 = vshrl.u32 %v471, 7
    %v473 = vsub.s32 %v331, %v472
    %v474 = vrot.slane %v326, %v473
    %v475 = vlaneseq
    %v476 = vshrl.u32 %v475, 7
    %v477 = vsub.s32 %v336, %v476
    %v478 = vrot.slane %v327, %v477
    %v479 = vsel %vm341, %v478, %v474
    %v480 = vlaneseq
    %v481 = vshrl.u32 %v480, 7
    %v482 = vsub.s32 %v343, %v481
    %v483 = vrot.slane %v328, %v482
    %v484 = vsel %vm348, %v483, %v479
    %v485 = vlaneseq
    %v486 = vshrl.u32 %v485, 7
    %v487 = vsub.s32 %v350, %v486
    %v488 = vrot.slane %v329, %v487
    %v489 = vsel %vm355, %v488, %v484
    %vm490 = vcmask 1041409
    %v491 = vsel %vm490, %v375, %v356
    %vm492 = vcmask 1042434
    %v493 = vsel %vm492, %v394, %v491
    %vm494 = vcmask 1043459
    %v495 = vsel %vm494, %v413, %v493
    %vm496 = vcmask 1044484
    %v497 = vsel %vm496, %v432, %v495
    %vm498 = vcmask 1045509
    %v499 = vsel %vm498, %v451, %v497
    %vm500 = vcmask 1046534
    %v501 = vsel %vm500, %v470, %v499
    %vm502 = vcmask 1047559
    %v503 = vsel %vm502, %v489, %v501
    %v504 = vpack.c.b16 %v503, %v503
    %v509 = vunpack.c.l.b16 %v271
    %v510 = vunpack.c.l.b16 %v272
    %v511 = vunpack.c.l.b16 %v273
    %v512 = vunpack.c.l.b16 %v274
    %v513 = vpack.c.b16 %v510, %v509
    %v514 = vpack.c.b16 %v512, %v511
    %vm517 = vcmask 261120
    %v519 = vsel %vm517, %v504, 0
    %521 = vmatprep.subr.bf16.mxu0 0
    %522 = vmatpush1.bf16.msra.mxu0 0
    %523 = vmatprep.subr.bf16.mxu0 0
    %524 = vmatpush1.bf16.msra.mxu0 0
    %525 = vmatprep.subr.bf16.mxu0 0
    %526 = vmatpush1.bf16.msra.mxu0 0
    %527 = vmatprep.subr.bf16.mxu0 0
    %528 = vmatpush1.bf16.msra.mxu0 0
    %529 = vmatprep.subr.bf16.mxu0 0
    %530 = vmatpush1.bf16.msra.mxu0 0
    %531 = vmatprep.subr.bf16.mxu0 0
    %532 = vmatpush1.bf16.msra.mxu0 0
    %533 = vmatprep.subr.bf16.mxu0 0
    %534 = vmatpush1.bf16.msra.mxu0 %v514
    %535 = vmatprep.subr.bf16.mxu0 0
    %536 = vmatpush1.bf16.msra.mxu0 %v513
    %537 = vmatprep.subr.bf16.mxu0 0
    %538 = vmatpush2.bf16.msra.mxu0 0
    %539 = vmatprep.subr.bf16.mxu0 0
    %540 = vmatpush2.bf16.msra.mxu0 0
    %541 = vmatprep.subr.bf16.mxu0 0
    %542 = vmatpush2.bf16.msra.mxu0 0
    %543 = vmatprep.subr.bf16.mxu0 0
    %544 = vmatpush2.bf16.msra.mxu0 0
    %545 = vmatprep.subr.bf16.mxu0 0
    %546 = vmatpush2.bf16.msra.mxu0 0
    %547 = vmatprep.subr.bf16.mxu0 0
    %548 = vmatpush2.bf16.msra.mxu0 0
    %549 = vmatprep.subr.bf16.mxu0 0
    %550 = vmatpush2.bf16.msra.mxu0 0
    %551 = vmatprep.subr.bf16.mxu0 0
    %552 = vmatpush2.bf16.msra.mxu0 0
    %553 = vmatprep.mubr.bf16.mxu0 0
    %554 = vmatmul.mubr.bf16.gmra.mxu0 %v519
    %v555 = vpop.f32.mrf.mxu0
    %v556 = vadd.f32 %v280, %v555
    %v557 = vpop.f32.mrf.mxu0
    %v558 = vpop.f32.mrf.mxu0
    %v559 = vpop.f32.mrf.mxu0
    %560 = vdwg.mxu0
    %v561 = vtanh.pop %v556
    %v562 = vpack.c.bf16 %v561, %v561
    %v563 = vld [vmem:[#allocation7] sm:$0xf]
    %v564 = vld [vmem:[#allocation7 + $0x4] sm:$0xf]
    %v565 = vld [vmem:[#allocation7 + $0x8] sm:$0xf]
    %v566 = vld [vmem:[#allocation7 + $0xc] sm:$0xf]
    %v567 = vld [vmem:[#allocation7 + $0x10] sm:$0xf]
    %v568 = vld [vmem:[#allocation7 + $0x14] sm:$0xf]
    %v569 = vld [vmem:[#allocation7 + $0x18] sm:$0xf]
    %v570 = vld [vmem:[#allocation7 + $0x1c] sm:$0xf]
    %v571 = vld [vmem:[#allocation7 + $0x20] sm:$0xf]
    %v572 = vld [vmem:[#allocation7 + $0x24] sm:$0xf]
    %v573 = vld [vmem:[#allocation7 + $0x28] sm:$0xf]
    %v574 = vld [vmem:[#allocation7 + $0x2c] sm:$0xf]
    %v575 = vld [vmem:[#allocation7 + $0x30] sm:$0xf]
    %v576 = vld [vmem:[#allocation7 + $0x34] sm:$0xf]
    %v577 = vld [vmem:[#allocation7 + $0x38] sm:$0xf]
    %v578 = vld [vmem:[#allocation7 + $0x3c] sm:$0xf]
    %v579 = vld [vmem:[%s4] sm:$0x1]
    %v581 = vlaneseq
    %v582 = vshrl.u32 %v581, 7
    %v583 = vsub.s32 0, %v582
    %v584 = vrot.slane %v579, %v583
    %v602 = vunpack.c.l.b16 %v563
    %v603 = vunpack.c.l.b16 %v564
    %v604 = vunpack.c.l.b16 %v565
    %v605 = vunpack.c.l.b16 %v566
    %v606 = vunpack.c.l.b16 %v567
    %v607 = vunpack.c.l.b16 %v568
    %v608 = vunpack.c.l.b16 %v569
    %v609 = vunpack.c.l.b16 %v570
    %v610 = vunpack.c.l.b16 %v571
    %v611 = vunpack.c.l.b16 %v572
    %v612 = vunpack.c.l.b16 %v573
    %v613 = vunpack.c.l.b16 %v574
    %v614 = vunpack.c.l.b16 %v575
    %v615 = vunpack.c.l.b16 %v576
    %v616 = vunpack.c.l.b16 %v577
    %v617 = vunpack.c.l.b16 %v578
    %v618 = vpack.c.b16 %v603, %v602
    %v619 = vpack.c.b16 %v605, %v604
    %v620 = vpack.c.b16 %v607, %v606
    %v621 = vpack.c.b16 %v609, %v608
    %v622 = vpack.c.b16 %v611, %v610
    %v623 = vpack.c.b16 %v613, %v612
    %v624 = vpack.c.b16 %v615, %v614
    %v625 = vpack.c.b16 %v617, %v616
    %634 = vmatprep.subr.bf16.mxu0 0
    %635 = vmatpush1.bf16.msra.mxu0 %v625
    %636 = vmatprep.subr.bf16.mxu0 0
    %637 = vmatpush1.bf16.msra.mxu0 %v624
    %638 = vmatprep.subr.bf16.mxu0 0
    %639 = vmatpush1.bf16.msra.mxu0 %v623
    %640 = vmatprep.subr.bf16.mxu0 0
    %641 = vmatpush1.bf16.msra.mxu0 %v622
    %642 = vmatprep.subr.bf16.mxu0 0
    %643 = vmatpush1.bf16.msra.mxu0 %v621
    %644 = vmatprep.subr.bf16.mxu0 0
    %645 = vmatpush1.bf16.msra.mxu0 %v620
    %646 = vmatprep.subr.bf16.mxu0 0
    %647 = vmatpush1.bf16.msra.mxu0 %v619
    %648 = vmatprep.subr.bf16.mxu0 0
    %649 = vmatpush1.bf16.msra.mxu0 %v618
    %650 = vmatprep.subr.bf16.mxu0 0
    %651 = vmatpush2.bf16.msra.mxu0 0
    %652 = vmatprep.subr.bf16.mxu0 0
    %653 = vmatpush2.bf16.msra.mxu0 0
    %654 = vmatprep.subr.bf16.mxu0 0
    %655 = vmatpush2.bf16.msra.mxu0 0
    %656 = vmatprep.subr.bf16.mxu0 0
    %657 = vmatpush2.bf16.msra.mxu0 0
    %658 = vmatprep.subr.bf16.mxu0 0
    %659 = vmatpush2.bf16.msra.mxu0 0
    %660 = vmatprep.subr.bf16.mxu0 0
    %661 = vmatpush2.bf16.msra.mxu0 0
    %662 = vmatprep.subr.bf16.mxu0 0
    %663 = vmatpush2.bf16.msra.mxu0 0
    %664 = vmatprep.subr.bf16.mxu0 0
    %665 = vmatpush2.bf16.msra.mxu0 0
    %666 = vmatprep.mubr.bf16.mxu0 0
    %667 = vmatmul.mubr.bf16.gmra.mxu0 %v562
    %v668 = vpop.f32.mrf.mxu0
    %v669 = vadd.f32 %v584, %v668
    %v670 = vpop.f32.mrf.mxu0
    %v671 = vpop.f32.mrf.mxu0
    %v672 = vpop.f32.mrf.mxu0
    %673 = vdwg.mxu0
    %674 = vst [vmem:[#allocation8] sm:$0xff] %v669
    // Predicated region
    $region34: #{tpu_custom_call.1} parent=1 // pred_check
      _
    $region35: #{tpu_custom_call.1} parent=1 // pred_check_branch
      %676 = sbr.rel (0) target = $region37
    $region36: #{tpu_custom_call.1} parent=1 // pred_region
      %s678 = ssub.s32 128, 128
      %679 = vsyncadd [#allocation4], %s678
      %s681 = sshll.u32 [#allocation8], 4
      %s682 = int_to_ptr.vmem [resolvable:$true] %s681
      %684 = dma.vmem_to_hbm [thread:$0]  %s682, 128, %s5, [#allocation4]
    $region37: #{tpu_custom_call.1} parent=1 // pred_fallthru
      _
    // Predicated region
    $region38: #{tpu_custom_call.1} parent=1 // pred_check
      _
    $region39: #{tpu_custom_call.1} parent=1 // pred_check_branch
      %686 = sbr.rel (0) target = $region41
    $region40: #{tpu_custom_call.1} parent=1 // pred_region
      %687 = dma.done [#allocation4], 128
    $region41: #{tpu_custom_call.1} parent=1 // pred_fallthru
      _
    %688 = vsyncpa [#allocation3], 1
    %689 = vsyncpa [#allocation6], 1
    %690 = vsyncpa [#allocation4], 1

</llo_original>
